<compile_context>
chip_gen: v7x
topology: tpu7x:2x2x1
jax: 0.10.0
libtpu: 0.0.40
codegen_flags: <defaults>
</compile_context>

<pallas_src>
import jax
import jax.numpy as jnp
from jax.experimental import pallas as pl
from jax.experimental.pallas import tpu as pltpu

_LANE = 1024          # lane-dense slab width (multiple of 128)
_TARGET_ROWS = 512    # rows per tile -> 512*1024*4B = 2 MiB per f32 tile


def _critic_kernel(state_ref, action_ref, out_ref):
    # Elementwise add + ReLU on the VPU; fully hidden under the DMA pipeline.
    out_ref[...] = jnp.maximum(state_ref[...] + action_ref[...], 0.0)


def critic_forward(state: jax.Array, action: jax.Array) -> jax.Array:
    """Pallas equivalent of CriticNetWork.forward: relu(state + action)."""
    assert state.shape == action.shape, "kernel assumes matching shapes (no broadcasting)"
    assert state.dtype == action.dtype

    orig_shape = state.shape
    n = state.size

    # Flatten to a lane-dense slab. Pad (with zeros) to a multiple of _LANE;
    # relu(0 + 0) = 0 so padding is harmless and sliced off afterwards.
    pad = (-n) % _LANE
    s = jnp.ravel(state)
    a = jnp.ravel(action)
    if pad:
        s = jnp.pad(s, (0, pad))
        a = jnp.pad(a, (0, pad))
    rows = (n + pad) // _LANE
    s2 = s.reshape(rows, _LANE)
    a2 = a.reshape(rows, _LANE)

    # Tile rows: either the (8-aligned) target tile, or the full extent when small.
    tb = _TARGET_ROWS if rows >= _TARGET_ROWS else rows
    grid = (pl.cdiv(rows, tb),)
    spec = pl.BlockSpec((tb, _LANE), lambda i: (i, 0))

    out2 = pl.pallas_call(
        _critic_kernel,
        out_shape=jax.ShapeDtypeStruct((rows, _LANE), state.dtype),
        grid_spec=pl.GridSpec(
            grid=grid,
            in_specs=[spec, spec],
            out_specs=spec,
        ),
        compiler_params=pltpu.CompilerParams(
            dimension_semantics=("parallel",),
        ),
    )(s2, a2)

    return out2.reshape(-1)[:n].reshape(orig_shape)


if __name__ == "__main__":
    # CriticNetWork.__init__ defines no learnable parameters used in forward,
    # so there is nothing to initialize beyond the inputs.
    key = jax.random.PRNGKey(0)
    k_state, k_action = jax.random.split(key)

    batch, feat = 64, 256  # small shapes; exercises the lane-dense tiled path
    state = jax.random.normal(k_state, (batch, feat), dtype=jnp.float32)
    action = jax.random.normal(k_action, (batch, feat), dtype=jnp.float32)

    out = critic_forward(state, action)
    out = jax.block_until_ready(out)

    # Sanity check against the pure-JAX reference.
    ref = jnp.maximum(state + action, 0.0)
    assert out.shape == ref.shape and out.dtype == ref.dtype
    assert bool(jnp.allclose(out, ref, atol=1e-6))

    # Also check a shape that requires padding to the lane-dense slab.
    s2 = jax.random.normal(k_state, (16, 96), dtype=jnp.float32)
    a2 = jax.random.normal(k_action, (16, 96), dtype=jnp.float32)
    out2 = jax.block_until_ready(critic_forward(s2, a2))
    ref2 = jnp.maximum(s2 + a2, 0.0)
    assert bool(jnp.allclose(out2, ref2, atol=1e-6))

    print("KERNEL_OK")
</pallas_src>

<mosaic_0001>
module attributes {stable_mosaic.version = 11 : i64} {
  func.func @_critic_kernel(%arg0: i32, %arg1: memref<16x1024xf32, #tpu.memory_space<vmem>>, %arg2: memref<16x1024xf32, #tpu.memory_space<vmem>>, %arg3: memref<16x1024xf32, #tpu.memory_space<vmem>>) attributes {dimension_semantics = [#tpu.dimension_semantics<parallel>], iteration_bounds = array<i64: 1>, scalar_prefetch = 0 : i64, scratch_operands = 0 : i64, tpu.core_type = #tpu.core_type<tc>, window_params = [{transform_indices = @transform_0, window_bounds = array<i64: 16, 1024>}, {transform_indices = @transform_1, window_bounds = array<i64: 16, 1024>}, {transform_indices = @transform_2, window_bounds = array<i64: 16, 1024>}]} {
    %c0 = arith.constant 0 : index
    %c0_0 = arith.constant 0 : index
    %0 = vector.load %arg1[%c0, %c0_0] : memref<16x1024xf32, #tpu.memory_space<vmem>>, vector<16x1024xf32>
    %c0_1 = arith.constant 0 : index
    %c0_2 = arith.constant 0 : index
    %1 = vector.load %arg2[%c0_1, %c0_2] : memref<16x1024xf32, #tpu.memory_space<vmem>>, vector<16x1024xf32>
    %2 = arith.addf %0, %1 : vector<16x1024xf32>
    %cst = arith.constant 0.000000e+00 : f32
    %3 = vector.broadcast %cst : f32 to vector<16x1024xf32>
    %4 = arith.maximumf %2, %3 : vector<16x1024xf32>
    %c0_3 = arith.constant 0 : index
    %c0_4 = arith.constant 0 : index
    %5 = vector.load %arg3[%c0_3, %c0_4] : memref<16x1024xf32, #tpu.memory_space<vmem>>, vector<16x1024xf32>
    tpu.vector_store %arg3[%c0_3, %c0_4], %4 {strides = array<i32>} : memref<16x1024xf32, #tpu.memory_space<vmem>>, vector<16x1024xf32>,
    return
  }
  func.func @transform_0(%arg0: i32) -> (i32, i32) {
    %c0_i32 = arith.constant 0 : i32
    %c0_i32_0 = arith.constant 0 : i32
    return %arg0, %c0_i32 : i32, i32
  }
  func.func @transform_1(%arg0: i32) -> (i32, i32) {
    %c0_i32 = arith.constant 0 : i32
    %c0_i32_0 = arith.constant 0 : i32
    return %arg0, %c0_i32 : i32, i32
  }
  func.func @transform_2(%arg0: i32) -> (i32, i32) {
    %c0_i32 = arith.constant 0 : i32
    %c0_i32_0 = arith.constant 0 : i32
    return %arg0, %c0_i32 : i32, i32
  }
}

</mosaic_0001>

<llo_original>
// kernel: tpu_custom_call.1
$region0: #{tpu_custom_call.1}
  #allocation0 [shape = 'u32[]', space=smem, size = 0x4, offset = 0x4, fixed_abs, tag = 'smem constant byte address 0x4 - core index']
  #allocation1 [shape = 'u32[144,128]{1,0:T(1,128)}', space=vmem, size = 0x12000, scoped, tag = 'internal scratch']
  %s0 = inlined_call_operand.hbm [shape: f32[16,1024], index: 0, kind: input, shape index: {}]
  %s1 = inlined_call_operand.hbm [shape: f32[16,1024], index: 1, kind: input, shape index: {}]
  %s2 = inlined_call_operand.hbm [shape: f32[16,1024], index: 2, kind: output, shape index: {}]
  %s3 = sld [smem:[#allocation0]]
  $region26: #{tpu_custom_call.1} parent=0
    _
  %s5 = ssub.s32 1, %s3
  %s6 = scalar_select 0, %s5, %s3
  $region1: #{tpu_custom_call.1} parent=0
    #allocation2 [shape = 'u8[65536]{0}', space=vmem, size = 0x10000, scoped, tag = 'input window, operand 0, single buffered']
    #allocation3 [shape = 's32[1]{0}', space=sflag, size = 0x4, scoped, tag = 'scoped memory for tpu_custom_call.1']
    #allocation4 [shape = 's32[1]{0}', space=sflag, size = 0x4, scoped, tag = 'scoped memory for tpu_custom_call.1']
    #allocation5 [shape = 'u8[65536]{0}', space=vmem, size = 0x10000, scoped, tag = 'input window, operand 1, single buffered']
    #allocation6 [shape = 's32[1]{0}', space=sflag, size = 0x4, scoped, tag = 'scoped memory for tpu_custom_call.1']
    #allocation7 [shape = 'u8[65536]{0}', space=vmem, size = 0x10000, scoped, tag = 'output window, operand 0, single buffered']
    %7 = vsyncpa [#allocation3], 0
    %8 = vsyncpa [#allocation6], 0
    %9 = vsyncpa [#allocation4], 0
    // Predicated region
    $region2: #{tpu_custom_call.1} parent=1 // pred_check
      _
    $region3: #{tpu_custom_call.1} parent=1 // pred_check_branch
      %11 = sbr.rel (0) target = $region5
    $region4: #{tpu_custom_call.1} parent=1 // pred_region
      %s13 = ssub.s32 2048, 2048
      %14 = vsyncadd [#allocation3], %s13
      %s15 = sshll.u32 [#allocation2], 4
      %s16 = int_to_ptr.vmem [resolvable:$true] %s15
      %21 = dma.hbm_to_vmem [thread:$0]  %s0, 2048, %s16, [#allocation3], 1024, 1024, 64
    $region5: #{tpu_custom_call.1} parent=1 // pred_fallthru
      _
    // Predicated region
    $region6: #{tpu_custom_call.1} parent=1 // pred_check
      _
    $region7: #{tpu_custom_call.1} parent=1 // pred_check_branch
      %23 = sbr.rel (0) target = $region9
    $region8: #{tpu_custom_call.1} parent=1 // pred_region
      %s25 = ssub.s32 2048, 2048
      %26 = vsyncadd [#allocation6], %s25
      %s27 = sshll.u32 [#allocation5], 4
      %s28 = int_to_ptr.vmem [resolvable:$true] %s27
      %33 = dma.hbm_to_vmem [thread:$0]  %s1, 2048, %s28, [#allocation6], 1024, 1024, 64
    $region9: #{tpu_custom_call.1} parent=1 // pred_fallthru
      _
    // Predicated region
    $region10: #{tpu_custom_call.1} parent=1 // pred_check
      _
    $region11: #{tpu_custom_call.1} parent=1 // pred_check_branch
      %35 = sbr.rel (0) target = $region13
    $region12: #{tpu_custom_call.1} parent=1 // pred_region
      %36 = dma.done [#allocation3], 2048
    $region13: #{tpu_custom_call.1} parent=1 // pred_fallthru
      _
    // Predicated region
    $region14: #{tpu_custom_call.1} parent=1 // pred_check
      _
    $region15: #{tpu_custom_call.1} parent=1 // pred_check_branch
      %38 = sbr.rel (0) target = $region17
    $region16: #{tpu_custom_call.1} parent=1 // pred_region
      %39 = dma.done [#allocation6], 2048
    $region17: #{tpu_custom_call.1} parent=1 // pred_fallthru
      _
    %v40 = vld [vmem:[#allocation2] sm:$0xff]
    %v41 = vld [vmem:[#allocation2 + $0x8] sm:$0xff]
    %v42 = vld [vmem:[#allocation2 + $0x10] sm:$0xff]
    %v43 = vld [vmem:[#allocation2 + $0x18] sm:$0xff]
    %v44 = vld [vmem:[#allocation2 + $0x20] sm:$0xff]
    %v45 = vld [vmem:[#allocation2 + $0x28] sm:$0xff]
    %v46 = vld [vmem:[#allocation2 + $0x30] sm:$0xff]
    %v47 = vld [vmem:[#allocation2 + $0x38] sm:$0xff]
    %v48 = vld [vmem:[#allocation2 + $0x40] sm:$0xff]
    %v49 = vld [vmem:[#allocation2 + $0x48] sm:$0xff]
    %v50 = vld [vmem:[#allocation2 + $0x50] sm:$0xff]
    %v51 = vld [vmem:[#allocation2 + $0x58] sm:$0xff]
    %v52 = vld [vmem:[#allocation2 + $0x60] sm:$0xff]
    %v53 = vld [vmem:[#allocation2 + $0x68] sm:$0xff]
    %v54 = vld [vmem:[#allocation2 + $0x70] sm:$0xff]
    %v55 = vld [vmem:[#allocation2 + $0x78] sm:$0xff]
    %v56 = vld [vmem:[#allocation5] sm:$0xff]
    %v57 = vld [vmem:[#allocation5 + $0x8] sm:$0xff]
    %v58 = vld [vmem:[#allocation5 + $0x10] sm:$0xff]
    %v59 = vld [vmem:[#allocation5 + $0x18] sm:$0xff]
    %v60 = vld [vmem:[#allocation5 + $0x20] sm:$0xff]
    %v61 = vld [vmem:[#allocation5 + $0x28] sm:$0xff]
    %v62 = vld [vmem:[#allocation5 + $0x30] sm:$0xff]
    %v63 = vld [vmem:[#allocation5 + $0x38] sm:$0xff]
    %v64 = vld [vmem:[#allocation5 + $0x40] sm:$0xff]
    %v65 = vld [vmem:[#allocation5 + $0x48] sm:$0xff]
    %v66 = vld [vmem:[#allocation5 + $0x50] sm:$0xff]
    %v67 = vld [vmem:[#allocation5 + $0x58] sm:$0xff]
    %v68 = vld [vmem:[#allocation5 + $0x60] sm:$0xff]
    %v69 = vld [vmem:[#allocation5 + $0x68] sm:$0xff]
    %v70 = vld [vmem:[#allocation5 + $0x70] sm:$0xff]
    %v71 = vld [vmem:[#allocation5 + $0x78] sm:$0xff]
    %v72 = vadd.f32 %v40, %v56
    %v73 = vadd.f32 %v41, %v57
    %v74 = vadd.f32 %v42, %v58
    %v75 = vadd.f32 %v43, %v59
    %v76 = vadd.f32 %v44, %v60
    %v77 = vadd.f32 %v45, %v61
    %v78 = vadd.f32 %v46, %v62
    %v79 = vadd.f32 %v47, %v63
    %v80 = vadd.f32 %v48, %v64
    %v81 = vadd.f32 %v49, %v65
    %v82 = vadd.f32 %v50, %v66
    %v83 = vadd.f32 %v51, %v67
    %v84 = vadd.f32 %v52, %v68
    %v85 = vadd.f32 %v53, %v69
    %v86 = vadd.f32 %v54, %v70
    %v87 = vadd.f32 %v55, %v71
    %v88 = vmax.f32 %v72, 0.0
    %v89 = vmax.f32 %v73, 0.0
    %v90 = vmax.f32 %v74, 0.0
    %v91 = vmax.f32 %v75, 0.0
    %v92 = vmax.f32 %v76, 0.0
    %v93 = vmax.f32 %v77, 0.0
    %v94 = vmax.f32 %v78, 0.0
    %v95 = vmax.f32 %v79, 0.0
    %v96 = vmax.f32 %v80, 0.0
    %v97 = vmax.f32 %v81, 0.0
    %v98 = vmax.f32 %v82, 0.0
    %v99 = vmax.f32 %v83, 0.0
    %v100 = vmax.f32 %v84, 0.0
    %v101 = vmax.f32 %v85, 0.0
    %v102 = vmax.f32 %v86, 0.0
    %v103 = vmax.f32 %v87, 0.0
    %104 = vst [vmem:[#allocation7] sm:$0xff] %v88
    %105 = vst [vmem:[#allocation7 + $0x8] sm:$0xff] %v89
    %106 = vst [vmem:[#allocation7 + $0x10] sm:$0xff] %v90
    %107 = vst [vmem:[#allocation7 + $0x18] sm:$0xff] %v91
    %108 = vst [vmem:[#allocation7 + $0x20] sm:$0xff] %v92
    %109 = vst [vmem:[#allocation7 + $0x28] sm:$0xff] %v93
    %110 = vst [vmem:[#allocation7 + $0x30] sm:$0xff] %v94
    %111 = vst [vmem:[#allocation7 + $0x38] sm:$0xff] %v95
    %112 = vst [vmem:[#allocation7 + $0x40] sm:$0xff] %v96
    %113 = vst [vmem:[#allocation7 + $0x48] sm:$0xff] %v97
    %114 = vst [vmem:[#allocation7 + $0x50] sm:$0xff] %v98
    %115 = vst [vmem:[#allocation7 + $0x58] sm:$0xff] %v99
    %116 = vst [vmem:[#allocation7 + $0x60] sm:$0xff] %v100
    %117 = vst [vmem:[#allocation7 + $0x68] sm:$0xff] %v101
    %118 = vst [vmem:[#allocation7 + $0x70] sm:$0xff] %v102
    %119 = vst [vmem:[#allocation7 + $0x78] sm:$0xff] %v103
    // Predicated region
    $region18: #{tpu_custom_call.1} parent=1 // pred_check
      _
    $region19: #{tpu_custom_call.1} parent=1 // pred_check_branch
      %121 = sbr.rel (0) target = $region21
    $region20: #{tpu_custom_call.1} parent=1 // pred_region
      %s123 = ssub.s32 2048, 2048
      %124 = vsyncadd [#allocation4], %s123
      %s125 = sshll.u32 [#allocation7], 4
      %s126 = int_to_ptr.vmem [resolvable:$true] %s125
      %131 = dma.vmem_to_hbm [thread:$0]  %s126, 2048, %s2, [#allocation4], 1024, 1024, 64
    $region21: #{tpu_custom_call.1} parent=1 // pred_fallthru
      _
    // Predicated region
    $region22: #{tpu_custom_call.1} parent=1 // pred_check
      _
    $region23: #{tpu_custom_call.1} parent=1 // pred_check_branch
      %133 = sbr.rel (0) target = $region25
    $region24: #{tpu_custom_call.1} parent=1 // pred_region
      %134 = dma.done [#allocation4], 2048
    $region25: #{tpu_custom_call.1} parent=1 // pred_fallthru
      _
    %135 = vsyncpa [#allocation3], 1
    %136 = vsyncpa [#allocation6], 1
    %137 = vsyncpa [#allocation4], 1

</llo_original>
